<compile_context>
chip_gen: v7x
topology: tpu7x:2x2x1
jax: 0.10.0
libtpu: 0.0.40
codegen_flags: <defaults>
</compile_context>

<pallas_src>
import functools

import jax
import jax.numpy as jnp
from jax.experimental import pallas as pl
from jax.experimental.pallas import tpu as pltpu


def conv_block_kernel(x_ref, w_ref, b_ref, o_ref):
    """Fused conv-as-matmul + bias + ReLU. One MXU push for the whole batch.

    x_ref: (B*Ho, KH*W*Cin)   im2row activations (lane-major rows)
    w_ref: (KH*W*Cin, Wo*Cout) block-Toeplitz weight slab (W-padding folded in)
    b_ref: (1, Wo*Cout)        lane-dense bias row
    o_ref: (B*Ho, Wo*Cout)     lane-dense output (last dim = 128 lanes)
    """
    acc = jnp.dot(x_ref[...], w_ref[...], preferred_element_type=jnp.float32)
    acc = acc + b_ref[...]                       # single (1, N) broadcast add
    o_ref[...] = jnp.maximum(acc, 0.0).astype(o_ref.dtype)


def prepare_conv_block_params(w_hwio, bias, W, *, padding=1):
    """Weight-dependent preprocessing. Call ONCE per weight set, not per forward.

    Builds the block-Toeplitz slab
        w_t[kh*W*Cin + w*Cin + ci, wo*Cout + co] = w_hwio[kh, w - wo + pad, ci, co]
    (zero where the tap reads outside the unpadded width), i.e. the W-direction
    taps AND the W zero-padding are folded into the weights, plus the lane-dense
    bias row bias[co] at lane wo*Cout + co.
    """
    KH, KW, Cin, Cout = w_hwio.shape
    Wo = W + 2 * padding - KW + 1

    w_in = jnp.arange(W)
    wo = jnp.arange(Wo)
    kw_idx = w_in[:, None] - wo[None, :] + padding          # (W, Wo)
    valid = (kw_idx >= 0) & (kw_idx < KW)
    kw_clipped = jnp.clip(kw_idx, 0, KW - 1)

    # (KH, W, Wo, Cin, Cout) gather along the kw axis, masked outside the window.
    w_g = jnp.take(w_hwio, kw_clipped, axis=1)
    w_g = jnp.where(valid[None, :, :, None, None], w_g, jnp.zeros((), w_hwio.dtype))
    # -> (KH, W, Cin, Wo, Cout) -> (KH*W*Cin, Wo*Cout); kh-major ordering matches im2row.
    w_t = jnp.transpose(w_g, (0, 1, 3, 2, 4)).reshape(KH * W * Cin, Wo * Cout)

    b_row = jnp.tile(bias, Wo).reshape(1, Wo * Cout)
    # TODO(synk): cast w_t (and activations) to bf16 with f32 accumulation once this
    # conv sits inside a larger network at realistic channel counts.
    return w_t, b_row


@functools.partial(jax.jit, static_argnames=("KH", "KW", "padding", "Cout"))
def conv_block_apply(x_nhwc, w_t, b_row, *, KH, KW, padding, Cout):
    """Conv2d(stride=1, pad=padding) + bias + ReLU. x_nhwc: (B, H, W, Cin)."""
    B, H, W, Cin = x_nhwc.shape
    Hp = H + 2 * padding
    Ho = Hp - KH + 1
    Wo = W + 2 * padding - KW + 1

    # Pad only along H (W padding lives in the Toeplitz weights), lane-major rows.
    xp = jnp.pad(x_nhwc, ((0, 0), (padding, padding), (0, 0), (0, 0)))
    xp = xp.reshape(B, Hp, W * Cin)

    # im2row over H in the wrapper: (B, Ho, KH*W*Cin), kh-major in the last dim,
    # then fold batch into M -> one (B*Ho, K) @ (K, N) matmul in the kernel.
    xcat = jnp.concatenate([xp[:, kh:kh + Ho, :] for kh in range(KH)], axis=-1)
    M = B * Ho
    K = KH * W * Cin
    N = Wo * Cout
    x2d = xcat.reshape(M, K)

    # TODO(synk): at realistic H/W/Cin/Cout, tile M (H rows with halo) and N (Wo*Cout,
    # multiples of 256 for v6e/v7x MXU), set an explicit vmem_limit_bytes, re-derive
    # tiles for v7x's 64 MiB VMEM, and keep the weight slab single-buffered
    # (pl.Buffered(1)); whole-problem blocks are only appropriate at this toy size.
    out = pl.pallas_call(
        conv_block_kernel,
        out_shape=jax.ShapeDtypeStruct((M, N), x_nhwc.dtype),
        grid_spec=pltpu.PrefetchScalarGridSpec(
            num_scalar_prefetch=0,
            grid=(1,),
            in_specs=[
                pl.BlockSpec((M, K), lambda i: (0, 0)),
                pl.BlockSpec((K, N), lambda i: (0, 0)),
                pl.BlockSpec((1, N), lambda i: (0, 0)),
            ],
            out_specs=pl.BlockSpec((M, N), lambda i: (0, 0)),
        ),
        compiler_params=pltpu.CompilerParams(
            dimension_semantics=("arbitrary",)),
    )(x2d, w_t, b_row)

    return out.reshape(B, Ho, Wo, Cout)


def _reference(x_nhwc, w_hwio, bias, padding):
    ref = jax.lax.conv_general_dilated(
        x_nhwc, w_hwio, window_strides=(1, 1),
        padding=((padding, padding), (padding, padding)),
        dimension_numbers=("NHWC", "HWIO", "NHWC"))
    return jnp.maximum(ref + bias[None, None, None, :], 0.0)


if __name__ == "__main__":
    # Shapes implied by the module: ConvBlock(inc=4, outc=8), NCHW input (2, 4, 16, 16).
    B, Cin, H, W = 2, 4, 16, 16
    Cout, K, pad = 8, 3, 1

    key = jax.random.PRNGKey(0)
    kx, kw, kb = jax.random.split(key, 3)

    # Input in PyTorch NCHW convention, converted to NHWC for the kernel.
    x_nchw = jax.random.normal(kx, (B, Cin, H, W), dtype=jnp.float32)
    x_nhwc = jnp.transpose(x_nchw, (0, 2, 3, 1))

    # kaiming_uniform_-style init: bound = sqrt(6 / fan_in), fan_in = Cin*K*K.
    fan_in = Cin * K * K
    bound = (6.0 / fan_in) ** 0.5
    w_oihw = jax.random.uniform(kw, (Cout, Cin, K, K), dtype=jnp.float32,
                                minval=-bound, maxval=bound)
    w_hwio = jnp.transpose(w_oihw, (2, 3, 1, 0))
    bias = jnp.zeros((Cout,), jnp.float32)        # conv.bias.data.fill_(0.0)

    # Weight-dependent prep: done once per weight set, outside the per-call path.
    w_t, b_row = prepare_conv_block_params(w_hwio, bias, W, padding=pad)

    out = conv_block_apply(x_nhwc, w_t, b_row, KH=K, KW=K, padding=pad, Cout=Cout)
    out = jax.block_until_ready(out)

    ref = _reference(x_nhwc, w_hwio, bias, pad)
    assert out.shape == (B, H, W, Cout)
    assert jnp.allclose(out, ref, atol=1e-4, rtol=1e-4)

    # Extra coverage (review concern): exercise the lane-dense bias path with a
    # nonzero bias against the same reference.
    bias_nz = jax.random.normal(kb, (Cout,), dtype=jnp.float32)
    w_t_nz, b_row_nz = prepare_conv_block_params(w_hwio, bias_nz, W, padding=pad)
    out_nz = conv_block_apply(x_nhwc, w_t_nz, b_row_nz, KH=K, KW=K,
                              padding=pad, Cout=Cout)
    out_nz = jax.block_until_ready(out_nz)
    ref_nz = _reference(x_nhwc, w_hwio, bias_nz, pad)
    assert jnp.allclose(out_nz, ref_nz, atol=1e-4, rtol=1e-4)

    print("KERNEL_OK")
</pallas_src>

<mosaic_0001>
module attributes {stable_mosaic.version = 11 : i64} {
  func.func @conv_block_kernel(%arg0: i32, %arg1: memref<32x192xf32, #tpu.memory_space<vmem>>, %arg2: memref<192x128xf32, #tpu.memory_space<vmem>>, %arg3: memref<1x128xf32, #tpu.memory_space<vmem>>, %arg4: memref<32x128xf32, #tpu.memory_space<vmem>>) attributes {dimension_semantics = [#tpu.dimension_semantics<arbitrary>], iteration_bounds = array<i64: 1>, scalar_prefetch = 0 : i64, scratch_operands = 0 : i64, tpu.core_type = #tpu.core_type<tc>, window_params = [{pipeline_mode = #tpu.pipeline_mode<synchronous>, transform_indices = @transform_0, window_bounds = array<i64: 32, 192>}, {pipeline_mode = #tpu.pipeline_mode<synchronous>, transform_indices = @transform_1, window_bounds = array<i64: 192, 128>}, {pipeline_mode = #tpu.pipeline_mode<synchronous>, transform_indices = @transform_2, window_bounds = array<i64: 1, 128>}, {pipeline_mode = #tpu.pipeline_mode<synchronous>, transform_indices = @transform_3, window_bounds = array<i64: 32, 128>}]} {
    %c0 = arith.constant 0 : index
    %c0_0 = arith.constant 0 : index
    %0 = vector.load %arg1[%c0, %c0_0] : memref<32x192xf32, #tpu.memory_space<vmem>>, vector<32x192xf32>
    %c0_1 = arith.constant 0 : index
    %c0_2 = arith.constant 0 : index
    %1 = vector.load %arg2[%c0_1, %c0_2] : memref<192x128xf32, #tpu.memory_space<vmem>>, vector<192x128xf32>
    %cst = arith.constant dense<0.000000e+00> : vector<32x128xf32>
    %2 = tpu.matmul %0, %1, %cst {dimension_numbers = #tpu.dot_dimension_numbers<[1], [0], [0], [1], [0, 0, 1, 1], [], []>} : vector<32x192xf32>, vector<192x128xf32>, vector<32x128xf32> -> vector<32x128xf32>
    %c0_3 = arith.constant 0 : index
    %c0_4 = arith.constant 0 : index
    %3 = vector.load %arg3[%c0_3, %c0_4] : memref<1x128xf32, #tpu.memory_space<vmem>>, vector<1x128xf32>
    %4 = vector.broadcast %3 : vector<1x128xf32> to vector<32x128xf32>
    %5 = arith.addf %2, %4 : vector<32x128xf32>
    %cst_5 = arith.constant 0.000000e+00 : f32
    %6 = vector.broadcast %cst_5 : f32 to vector<32x128xf32>
    %7 = arith.maximumf %5, %6 : vector<32x128xf32>
    %c0_6 = arith.constant 0 : index
    %c0_7 = arith.constant 0 : index
    %8 = vector.load %arg4[%c0_6, %c0_7] : memref<32x128xf32, #tpu.memory_space<vmem>>, vector<32x128xf32>
    tpu.vector_store %arg4[%c0_6, %c0_7], %7 {strides = array<i32>} : memref<32x128xf32, #tpu.memory_space<vmem>>, vector<32x128xf32>,
    return
  }
  func.func @transform_0(%arg0: i32) -> (i32, i32) {
    %c0_i32 = arith.constant 0 : i32
    %c0_i32_0 = arith.constant 0 : i32
    %c0_i32_1 = arith.constant 0 : i32
    return %c0_i32, %c0_i32_0 : i32, i32
  }
  func.func @transform_1(%arg0: i32) -> (i32, i32) {
    %c0_i32 = arith.constant 0 : i32
    %c0_i32_0 = arith.constant 0 : i32
    %c0_i32_1 = arith.constant 0 : i32
    return %c0_i32, %c0_i32_0 : i32, i32
  }
  func.func @transform_2(%arg0: i32) -> (i32, i32) {
    %c0_i32 = arith.constant 0 : i32
    %c0_i32_0 = arith.constant 0 : i32
    %c0_i32_1 = arith.constant 0 : i32
    return %c0_i32, %c0_i32_0 : i32, i32
  }
  func.func @transform_3(%arg0: i32) -> (i32, i32) {
    %c0_i32 = arith.constant 0 : i32
    %c0_i32_0 = arith.constant 0 : i32
    %c0_i32_1 = arith.constant 0 : i32
    return %c0_i32, %c0_i32_0 : i32, i32
  }
}

</mosaic_0001>

<llo_original>
// kernel: conv_block_apply.1
$region0: #{conv_block_apply.1}
  #allocation0 [shape = 'u32[]', space=smem, size = 0x4, offset = 0x4, fixed_abs, tag = 'smem constant byte address 0x4 - core index']
  #allocation1 [shape = 'u32[144,128]{1,0:T(1,128)}', space=vmem, size = 0x12000, scoped, tag = 'internal scratch']
  %s0 = inlined_call_operand.vmem [shape: f32[32,192], index: 0, kind: input, shape index: {}]
  %s1 = inlined_call_operand.vmem [shape: f32[192,128], index: 1, kind: input, shape index: {}]
  %s2 = inlined_call_operand.vmem [shape: f32[1,128], index: 2, kind: input, shape index: {}]
  %s3 = inlined_call_operand.vmem [shape: f32[32,128], index: 3, kind: output, shape index: {}]
  %s4 = sld [smem:[#allocation0]]
  $region22: #{conv_block_apply.1} parent=0
    _
  %s6 = ssub.s32 1, %s4
  %s7 = scalar_select 0, %s6, %s4
  // Predicated region
  $region2: #{conv_block_apply.1} parent=0 // pred_check
    _
  $region3: #{conv_block_apply.1} parent=0 // pred_check_branch
    %9 = sbr.rel (0) target = $region5
  $region4: #{conv_block_apply.1} parent=0 // pred_region
    _
  $region5: #{conv_block_apply.1} parent=0 // pred_fallthru
    _
  // Predicated region
  $region6: #{conv_block_apply.1} parent=0 // pred_check
    _
  $region7: #{conv_block_apply.1} parent=0 // pred_check_branch
    %11 = sbr.rel (0) target = $region9
  $region8: #{conv_block_apply.1} parent=0 // pred_region
    _
  $region9: #{conv_block_apply.1} parent=0 // pred_fallthru
    _
  // Predicated region
  $region10: #{conv_block_apply.1} parent=0 // pred_check
    _
  $region11: #{conv_block_apply.1} parent=0 // pred_check_branch
    %13 = sbr.rel (0) target = $region13
  $region12: #{conv_block_apply.1} parent=0 // pred_region
    _
  $region13: #{conv_block_apply.1} parent=0 // pred_fallthru
    _
  %v14 = vld [vmem:[%s0] sm:$0xff]
  %v15 = vld [vmem:[%s0 + $0x8] sm:$0xff]
  %v16 = vld [vmem:[%s0 + $0x10] sm:$0xff]
  %v17 = vld [vmem:[%s0 + $0x18] sm:$0xff]
  %v18 = vld [vmem:[%s0 + $0x20] sm:$0xff]
  %v19 = vld [vmem:[%s0 + $0x28] sm:$0xff]
  %v20 = vld [vmem:[%s0 + $0x30] sm:$0xff]
  %v21 = vld [vmem:[%s0 + $0x38] sm:$0xff]
  %v22 = vld [vmem:[%s1] sm:$0xff]
  %v23 = vld [vmem:[%s1 + $0x8] sm:$0xff]
  %v24 = vld [vmem:[%s1 + $0x10] sm:$0xff]
  %v25 = vld [vmem:[%s1 + $0x18] sm:$0xff]
  %v26 = vld [vmem:[%s1 + $0x20] sm:$0xff]
  %v27 = vld [vmem:[%s1 + $0x28] sm:$0xff]
  %v28 = vld [vmem:[%s1 + $0x30] sm:$0xff]
  %v29 = vld [vmem:[%s1 + $0x38] sm:$0xff]
  %v30 = vld [vmem:[%s1 + $0x40] sm:$0xff]
  %v31 = vld [vmem:[%s1 + $0x48] sm:$0xff]
  %v32 = vld [vmem:[%s1 + $0x50] sm:$0xff]
  %v33 = vld [vmem:[%s1 + $0x58] sm:$0xff]
  %v34 = vld [vmem:[%s1 + $0x60] sm:$0xff]
  %v35 = vld [vmem:[%s1 + $0x68] sm:$0xff]
  %v36 = vld [vmem:[%s1 + $0x70] sm:$0xff]
  %v37 = vld [vmem:[%s1 + $0x78] sm:$0xff]
  %v38 = vld [vmem:[%s1 + $0x80] sm:$0xff]
  %v39 = vld [vmem:[%s1 + $0x88] sm:$0xff]
  %v40 = vld [vmem:[%s1 + $0x90] sm:$0xff]
  %v41 = vld [vmem:[%s1 + $0x98] sm:$0xff]
  %v42 = vld [vmem:[%s1 + $0xa0] sm:$0xff]
  %v43 = vld [vmem:[%s1 + $0xa8] sm:$0xff]
  %v44 = vld [vmem:[%s1 + $0xb0] sm:$0xff]
  %v45 = vld [vmem:[%s1 + $0xb8] sm:$0xff]
  %v46 = vld [vmem:[%s2] sm:$0x1]
  %v48 = vlaneseq
  %v49 = vshrl.u32 %v48, 7
  %v50 = vsub.s32 0, %v49
  %v51 = vrot.slane %v46, %v50
  %vm53 = vcmask 523264
  %v55 = vsel %vm53, %v15, 0
  %v58 = vsel %vm53, %v17, 0
  %v61 = vsel %vm53, %v19, 0
  %v64 = vsel %vm53, %v21, 0
  %66 = vmatprep.subr.mxu0 0.0
  %67 = vmatpush1.msra.mxu0 %v22
  %68 = vmatprep.subr.mxu0 0.0
  %69 = vmatpush1.msra.mxu0 %v23
  %70 = vmatprep.subr.mxu0 0.0
  %71 = vmatpush1.msra.mxu0 %v24
  %72 = vmatprep.subr.mxu0 0.0
  %73 = vmatpush1.msra.mxu0 %v25
  %74 = vmatprep.subr.mxu0 0.0
  %75 = vmatpush1.msra.mxu0 %v26
  %76 = vmatprep.subr.mxu0 0.0
  %77 = vmatpush1.msra.mxu0 %v27
  %78 = vmatprep.subr.mxu0 0.0
  %79 = vmatpush1.msra.mxu0 %v28
  %80 = vmatprep.subr.mxu0 0.0
  %81 = vmatpush1.msra.mxu0 %v29
  %82 = vmatprep.subr.mxu0 0.0
  %83 = vmatpush1.msra.mxu0 %v30
  %84 = vmatprep.subr.mxu0 0.0
  %85 = vmatpush1.msra.mxu0 %v31
  %86 = vmatprep.subr.mxu0 0.0
  %87 = vmatpush1.msra.mxu0 %v32
  %88 = vmatprep.subr.mxu0 0.0
  %89 = vmatpush1.msra.mxu0 %v33
  %90 = vmatprep.subr.mxu0 0.0
  %91 = vmatpush1.msra.mxu0 %v34
  %92 = vmatprep.subr.mxu0 0.0
  %93 = vmatpush1.msra.mxu0 %v35
  %94 = vmatprep.subr.mxu0 0.0
  %95 = vmatpush1.msra.mxu0 %v36
  %96 = vmatprep.subr.mxu0 0.0
  %97 = vmatpush1.msra.mxu0 %v37
  %98 = vmatprep.subr.mxu0 0.0
  %99 = vmatpush1.msra.mxu0 %v38
  %100 = vmatprep.subr.mxu0 0.0
  %101 = vmatpush1.msra.mxu0 %v39
  %102 = vmatprep.subr.mxu0 0.0
  %103 = vmatpush1.msra.mxu0 %v40
  %104 = vmatprep.subr.mxu0 0.0
  %105 = vmatpush1.msra.mxu0 %v41
  %106 = vmatprep.subr.mxu0 0.0
  %107 = vmatpush1.msra.mxu0 %v42
  %108 = vmatprep.subr.mxu0 0.0
  %109 = vmatpush1.msra.mxu0 %v43
  %110 = vmatprep.subr.mxu0 0.0
  %111 = vmatpush1.msra.mxu0 %v44
  %112 = vmatprep.subr.mxu0 0.0
  %113 = vmatpush1.msra.mxu0 %v45
  %114 = vmatprep.subr.mxu0 0.0
  %115 = vmatpush1.msra.mxu0 0.0
  %116 = vmatprep.subr.mxu0 0.0
  %117 = vmatpush1.msra.mxu0 0.0
  %118 = vmatprep.subr.mxu0 0.0
  %119 = vmatpush1.msra.mxu0 0.0
  %120 = vmatprep.subr.mxu0 0.0
  %121 = vmatpush1.msra.mxu0 0.0
  %122 = vmatprep.subr.mxu0 0.0
  %123 = vmatpush1.msra.mxu0 0.0
  %124 = vmatprep.subr.mxu0 0.0
  %125 = vmatpush1.msra.mxu0 0.0
  %126 = vmatprep.subr.mxu0 0.0
  %127 = vmatpush1.msra.mxu0 0.0
  %128 = vmatprep.subr.mxu0 0.0
  %129 = vmatpush1.msra.mxu0 0.0
  %130 = vmatprep.mubr.f32.mxu0 %v55
  %131 = vmatmul.mubr.f32.gmra.mrb[0].mxu0 %v14
  %v132 = vpop.f32.mrb[0].mxu0
  %v133 = vadd.f32 %v51, %v132
  %v134 = vpop.f32.mrb[0].mxu0
  %135 = vmatprep.mubr.f32.mxu0 %v58
  %136 = vmatmul.mubr.f32.gmra.mrb[0].mxu0 %v16
  %v137 = vpop.f32.mrb[0].mxu0
  %v138 = vadd.f32 %v51, %v137
  %v139 = vpop.f32.mrb[0].mxu0
  %140 = vmatprep.mubr.f32.mxu0 %v61
  %141 = vmatmul.mubr.f32.gmra.mrb[0].mxu0 %v18
  %v142 = vpop.f32.mrb[0].mxu0
  %v143 = vadd.f32 %v51, %v142
  %v144 = vpop.f32.mrb[0].mxu0
  %145 = vmatprep.mubr.f32.mxu0 %v64
  %146 = vmatmul.mubr.f32.gmra.mrb[0].mxu0 %v20
  %v147 = vpop.f32.mrb[0].mxu0
  %v148 = vadd.f32 %v51, %v147
  %v149 = vpop.f32.mrb[0].mxu0
  %150 = vdwg.mxu0
  %v151 = vmax.f32 %v133, 0.0
  %v152 = vmax.f32 %v138, 0.0
  %v153 = vmax.f32 %v143, 0.0
  %v154 = vmax.f32 %v148, 0.0
  %155 = vst [vmem:[%s3] sm:$0xff] %v151
  %156 = vst [vmem:[%s3 + $0x8] sm:$0xff] %v152
  %157 = vst [vmem:[%s3 + $0x10] sm:$0xff] %v153
  %158 = vst [vmem:[%s3 + $0x18] sm:$0xff] %v154
  // Predicated region
  $region14: #{conv_block_apply.1} parent=0 // pred_check
    _
  $region15: #{conv_block_apply.1} parent=0 // pred_check_branch
    %160 = sbr.rel (0) target = $region17
  $region16: #{conv_block_apply.1} parent=0 // pred_region
    _
  $region17: #{conv_block_apply.1} parent=0 // pred_fallthru
    _
  // Predicated region
  $region18: #{conv_block_apply.1} parent=0 // pred_check
    _
  $region19: #{conv_block_apply.1} parent=0 // pred_check_branch
    %162 = sbr.rel (0) target = $region21
  $region20: #{conv_block_apply.1} parent=0 // pred_region
    _
  $region21: #{conv_block_apply.1} parent=0 // pred_fallthru
    _

</llo_original>
